<compile_context>
chip_gen: v7x
topology: tpu7x:2x2x1
jax: 0.10.0
libtpu: 0.0.40
codegen_flags: <defaults>
</compile_context>

<pallas_src>
import jax
import jax.numpy as jnp
from jax.experimental import pallas as pl
from jax.experimental.pallas import tpu as pltpu


def _scale_add_kernel(params_ref, x_ref, o_ref):
    # params_ref: (2,) scalars in SMEM (p0, c); x_ref/o_ref: (tile_b, H*W) VMEM
    o_ref[...] = (params_ref[0] * x_ref[...] + params_ref[1]).astype(o_ref.dtype)


def _scale_kernel(params_ref, x_ref, o_ref):
    # params_ref: (1,) scalar in SMEM (p0); x_ref/o_ref: (tile_b, H*W) VMEM
    o_ref[...] = (params_ref[0] * x_ref[...]).astype(o_ref.dtype)


def _choose_tile_rows(n_rows, row_elems, bytes_per_elem=4,
                      budget_bytes=2 * 1024 * 1024):
    """Largest row-tile that keeps a double-buffered in+out pair well under
    the scoped-VMEM default on every generation (v5e 16MiB, v6e/v7x 32MiB)."""
    max_rows = max(1, budget_bytes // (row_elems * bytes_per_elem))
    tile = min(n_rows, max_rows)
    while n_rows % tile != 0:   # keep blocks evenly dividing (no ragged tail)
        tile -= 1
    return tile


def concrete_model_forward(x, p0, c, constant):
    """y = p0 * x[:, 0] (+ c if constant).  x: (B, C, H, W) float32 -> (B, H, W)."""
    B, C, H, W = x.shape
    hw = H * W

    # Free (contiguous) view: channel 0 of batch b lives in columns [0, hw).
    x2 = x.reshape(B, C * hw)

    tile_b = _choose_tile_rows(B, hw)
    grid = (pl.cdiv(B, tile_b),)

    p0_s = jnp.asarray(p0, jnp.float32).reshape(-1)[:1]
    if constant:
        c_s = jnp.asarray(c, jnp.float32).reshape(-1)[:1]
        params = jnp.concatenate([p0_s, c_s])           # (2,) in SMEM
        kernel = _scale_add_kernel
    else:
        params = p0_s                                   # (1,) in SMEM
        kernel = _scale_kernel

    out2 = pl.pallas_call(
        kernel,
        out_shape=jax.ShapeDtypeStruct((B, hw), x.dtype),
        grid_spec=pltpu.PrefetchScalarGridSpec(
            num_scalar_prefetch=1,                      # params -> SMEM
            grid=grid,
            in_specs=[
                # Fetch ONLY channel 0: column-block 0 of the (B, C*H*W) view.
                pl.BlockSpec((tile_b, hw), lambda i, s: (i, 0)),
            ],
            out_specs=pl.BlockSpec((tile_b, hw), lambda i, s: (i, 0)),
        ),
        compiler_params=pltpu.CompilerParams(
            dimension_semantics=("parallel",),
        ),
    )(params, x2)

    return out2.reshape(B, H, W)                        # free bitcast back


if __name__ == "__main__":
    key = jax.random.PRNGKey(0)
    kx, kp, kc = jax.random.split(key, 3)

    B, C, H, W = 2, 4, 16, 16
    x = jax.random.normal(kx, (B, C, H, W), dtype=jnp.float32)
    # deterministic "parameters" standing in for torch.rand(1)
    p0 = jax.random.uniform(kp, (1,), dtype=jnp.float32)
    c = jax.random.uniform(kc, (1,), dtype=jnp.float32)

    # constant=True branch
    y = concrete_model_forward(x, p0, c, True)
    jax.block_until_ready(y)
    y_ref = p0[0] * x[:, 0] + c[0]
    assert y.shape == (B, H, W)
    assert jnp.allclose(y, y_ref, atol=1e-6), "mismatch vs reference (constant=True)"

    # constant=False branch (no add traced at all)
    y2 = concrete_model_forward(x, p0, c, False)
    jax.block_until_ready(y2)
    assert jnp.allclose(y2, p0[0] * x[:, 0], atol=1e-6), "mismatch vs reference (constant=False)"

    print("KERNEL_OK")
</pallas_src>

<mosaic_0001>
module attributes {stable_mosaic.version = 11 : i64} {
  func.func @_scale_add_kernel(%arg0: i32, %arg1: memref<2xf32, #tpu.memory_space<smem>>, %arg2: memref<2x256xf32, #tpu.memory_space<vmem>>, %arg3: memref<2x256xf32, #tpu.memory_space<vmem>>) attributes {dimension_semantics = [#tpu.dimension_semantics<parallel>], iteration_bounds = array<i64: 1>, scalar_prefetch = 1 : i64, scratch_operands = 0 : i64, tpu.core_type = #tpu.core_type<tc>, window_params = [{transform_indices = @transform_0, window_bounds = array<i64: 2, 256>}, {transform_indices = @transform_1, window_bounds = array<i64: 2, 256>}]} {
    %c0 = arith.constant 0 : index
    %0 = memref.load %arg1[%c0] : memref<2xf32, #tpu.memory_space<smem>>
    %c0_0 = arith.constant 0 : index
    %c0_1 = arith.constant 0 : index
    %1 = vector.load %arg2[%c0_0, %c0_1] : memref<2x256xf32, #tpu.memory_space<vmem>>, vector<2x256xf32>
    %2 = vector.broadcast %0 : f32 to vector<2x256xf32>
    %3 = arith.mulf %2, %1 : vector<2x256xf32>
    %c1 = arith.constant 1 : index
    %4 = memref.load %arg1[%c1] : memref<2xf32, #tpu.memory_space<smem>>
    %5 = vector.broadcast %4 : f32 to vector<2x256xf32>
    %6 = arith.addf %3, %5 : vector<2x256xf32>
    %c0_2 = arith.constant 0 : index
    %c0_3 = arith.constant 0 : index
    %7 = vector.load %arg3[%c0_2, %c0_3] : memref<2x256xf32, #tpu.memory_space<vmem>>, vector<2x256xf32>
    tpu.vector_store %arg3[%c0_2, %c0_3], %6 {strides = array<i32>} : memref<2x256xf32, #tpu.memory_space<vmem>>, vector<2x256xf32>,
    return
  }
  func.func @transform_0(%arg0: i32, %arg1: memref<2xf32, #tpu.memory_space<smem>>) -> (i32, i32) {
    %c0_i32 = arith.constant 0 : i32
    %c0_i32_0 = arith.constant 0 : i32
    return %arg0, %c0_i32 : i32, i32
  }
  func.func @transform_1(%arg0: i32, %arg1: memref<2xf32, #tpu.memory_space<smem>>) -> (i32, i32) {
    %c0_i32 = arith.constant 0 : i32
    %c0_i32_0 = arith.constant 0 : i32
    return %arg0, %c0_i32 : i32, i32
  }
}

</mosaic_0001>

<llo_original>
// kernel: tpu_custom_call.1
$region0: #{tpu_custom_call.1}
  #allocation0 [shape = 'u32[]', space=smem, size = 0x4, offset = 0x4, fixed_abs, tag = 'smem constant byte address 0x4 - core index']
  #allocation1 [shape = 'u32[144,128]{1,0:T(1,128)}', space=vmem, size = 0x12000, scoped, tag = 'internal scratch']
  #allocation2 [shape = 's32[1]{0}', space=sflag, size = 0x4, scoped, tag = 'scoped memory for tpu_custom_call.1']
  #allocation3 [shape = 'u8[512]{0}', space=smem, size = 0x200, scoped, tag = 'prefetched SMEM operand 0']
  %s0 = inlined_call_operand.hbm [shape: f32[2], index: 0, kind: input, shape index: {}]
  %s1 = inlined_call_operand.hbm [shape: f32[2,1024], index: 1, kind: input, shape index: {}]
  %s2 = inlined_call_operand.hbm [shape: f32[2,256], index: 2, kind: output, shape index: {}]
  %s3 = sld [smem:[#allocation0]]
  $region18: #{tpu_custom_call.1} parent=0
    _
  %s5 = ssub.s32 1, %s3
  %s6 = scalar_select 0, %s5, %s3
  %8 = dma.hbm_to_smem %s0, 16, [#allocation3], [#allocation2]
  %9 = dma.done [#allocation2], 16
  %10 = sfence
  $region1: #{tpu_custom_call.1} parent=0
    #allocation4 [shape = 'u8[2048]{0}', space=vmem, size = 0x800, scoped, tag = 'input window, operand 1, single buffered']
    #allocation5 [shape = 's32[1]{0}', space=sflag, size = 0x4, scoped, tag = 'scoped memory for tpu_custom_call.1']
    #allocation6 [shape = 's32[1]{0}', space=sflag, size = 0x4, scoped, tag = 'scoped memory for tpu_custom_call.1']
    #allocation7 [shape = 'u8[2048]{0}', space=vmem, size = 0x800, scoped, tag = 'output window, operand 0, single buffered']
    %11 = vsyncpa [#allocation5], 0
    %12 = vsyncpa [#allocation6], 0
    // Predicated region
    $region2: #{tpu_custom_call.1} parent=1 // pred_check
      _
    $region3: #{tpu_custom_call.1} parent=1 // pred_check_branch
      %14 = sbr.rel (0) target = $region5
    $region4: #{tpu_custom_call.1} parent=1 // pred_region
      %s16 = ssub.s32 64, 64
      %17 = vsyncadd [#allocation5], %s16
      %s19 = sshll.u32 [#allocation4], 4
      %s20 = int_to_ptr.vmem [resolvable:$true] %s19
      %22 = dma.hbm_to_vmem [thread:$0]  %s1, 64, %s20, [#allocation5]
    $region5: #{tpu_custom_call.1} parent=1 // pred_fallthru
      _
    // Predicated region
    $region6: #{tpu_custom_call.1} parent=1 // pred_check
      _
    $region7: #{tpu_custom_call.1} parent=1 // pred_check_branch
      %24 = sbr.rel (0) target = $region9
    $region8: #{tpu_custom_call.1} parent=1 // pred_region
      %25 = dma.done [#allocation5], 64
    $region9: #{tpu_custom_call.1} parent=1 // pred_fallthru
      _
    %s26 = sld [smem:[#allocation3]]
    %v27 = vld [vmem:[#allocation4] sm:$0xf]
    %v28 = vstv %s26
    %v29 = vmul.f32 %v28, %v27
    %s30 = sld [smem:[#allocation3 + $0x1]]
    %v31 = vstv %s30
    %v32 = vadd.f32 %v29, %v31
    %33 = vst [vmem:[#allocation7] sm:$0xf] %v32
    // Predicated region
    $region10: #{tpu_custom_call.1} parent=1 // pred_check
      _
    $region11: #{tpu_custom_call.1} parent=1 // pred_check_branch
      %35 = sbr.rel (0) target = $region13
    $region12: #{tpu_custom_call.1} parent=1 // pred_region
      %s37 = ssub.s32 64, 64
      %38 = vsyncadd [#allocation6], %s37
      %s40 = sshll.u32 [#allocation7], 4
      %s41 = int_to_ptr.vmem [resolvable:$true] %s40
      %43 = dma.vmem_to_hbm [thread:$0]  %s41, 64, %s2, [#allocation6]
    $region13: #{tpu_custom_call.1} parent=1 // pred_fallthru
      _
    // Predicated region
    $region14: #{tpu_custom_call.1} parent=1 // pred_check
      _
    $region15: #{tpu_custom_call.1} parent=1 // pred_check_branch
      %45 = sbr.rel (0) target = $region17
    $region16: #{tpu_custom_call.1} parent=1 // pred_region
      %46 = dma.done [#allocation6], 64
    $region17: #{tpu_custom_call.1} parent=1 // pred_fallthru
      _
    %47 = vsyncpa [#allocation5], 1
    %48 = vsyncpa [#allocation6], 1

</llo_original>
